<compile_context>
chip_gen: v6e
topology: v6e:2x2x1
jax: 0.10.0
libtpu: 0.0.40
codegen_flags: <defaults>
</compile_context>

<pallas_src>
import math
from functools import partial

import jax
import jax.numpy as jnp
from jax.experimental import pallas as pl
from jax.experimental.pallas import tpu as pltpu


def _round_up(x, m):
    return ((x + m - 1) // m) * m


def _physical_vmem_bytes():
    try:
        info = pltpu.get_tpu_info()
        for attr in ("vmem_capacity_bytes", "vmem_size_bytes", "vmem_bytes"):
            v = getattr(info, attr, None)
            if v:
                return int(v)
    except Exception:
        pass
    return 64 << 20  # conservative default (v7x per-TensorCore VMEM)


def _gelu(h, tanh_approx):
    if tanh_approx:
        # tanh-approx runs on the EUP slot (cheaper on v6e/v7x) but differs
        # slightly from nn.GELU(approximate='none'); off by default.
        c = math.sqrt(2.0 / math.pi)
        return 0.5 * h * (1.0 + jnp.tanh(c * (h + 0.044715 * (h * h * h))))
    return 0.5 * h * (1.0 + jax.lax.erf(h * (1.0 / math.sqrt(2.0))))


def mlp_kernel_resident(x_ref, w1_ref, b1_ref, w2_ref, b2_ref, o_ref, *,
                        gelu_tanh):
    # Full hidden dim resident: one fc1 + GELU + fc2 per row tile.
    h = jnp.dot(x_ref[...], w1_ref[...],
                preferred_element_type=jnp.float32) + b1_ref[...]
    h = _gelu(h, gelu_tanh)
    y = jnp.dot(h.astype(w2_ref.dtype), w2_ref[...],
                preferred_element_type=jnp.float32) + b2_ref[...]
    o_ref[...] = y.astype(o_ref.dtype)


def mlp_kernel_streamed(x_ref, w1_ref, b1_ref, w2_ref, b2_ref, o_ref, acc_ref,
                        *, gelu_tanh):
    k = pl.program_id(1)

    @pl.when(k == 0)
    def _():
        # Fold fc2 bias into the accumulator init -> epilogue is a pure cast
        # + unmasked lane-dense store.
        acc_ref[...] = jnp.broadcast_to(b2_ref[...], acc_ref.shape)

    # fc1 on this hidden block + GELU (f32 elementwise; safe on v5e's VPU).
    h = jnp.dot(x_ref[...], w1_ref[...],
                preferred_element_type=jnp.float32) + b1_ref[...]
    h = _gelu(h, gelu_tanh)

    # fc2 partial sum over this hidden block (f32 accumulation).
    acc_ref[...] += jnp.dot(h.astype(w2_ref.dtype), w2_ref[...],
                            preferred_element_type=jnp.float32)

    @pl.when(k == pl.num_programs(1) - 1)
    def _():
        o_ref[...] = acc_ref[...].astype(o_ref.dtype)


def _vmem_needed(tm, th, C, Cout, in_isz, out_isz, streamed):
    xb = tm * C * in_isz
    w1b = C * th * in_isz
    b1b = th * 4
    w2b = th * Cout * in_isz
    b2b = Cout * 4
    ob = tm * Cout * out_isz
    hbuf = 3 * tm * th * 4              # GELU intermediate + elementwise temps
    accb = tm * Cout * 4 if streamed else 0
    # Inputs/outputs double-buffered by the pipeline; scratch + margin on top.
    return 2 * (xb + w1b + b1b + w2b + b2b + ob) + hbuf + accb + (4 << 20)


def mlp_pallas(x, w1, b1, w2, b2, *, tm=512, th=1024,
               matmul_dtype=jnp.bfloat16, gelu_tanh=False,
               force_stream=False):
    """y = fc2(gelu(fc1(x))); dropout (p=0.0) is the identity."""
    *lead, C = x.shape
    H = w1.shape[1]
    Cout = w2.shape[1]
    out_dtype = x.dtype

    x2 = x.reshape(-1, C).astype(matmul_dtype)
    M = x2.shape[0]

    # Row tile: multiple of 8 sublanes; pad M up to a whole number of tiles
    # (handles ViT token counts like B*197 without assertions).
    tm = max(8, min(_round_up(tm, 8), _round_up(M, 8)))
    M_pad = _round_up(M, tm)
    # Prefer >= 2 row tiles so the "parallel" axis can split across v7x's
    # two TensorCores.
    if M_pad == tm and tm >= 16 and (tm // 2) % 8 == 0:
        tm = tm // 2
        M_pad = _round_up(M, tm)
    if M_pad != M:
        x2 = jnp.pad(x2, ((0, M_pad - M), (0, 0)))

    # Matmul operands in (possibly) bf16; biases stay f32.
    w1c = w1.astype(matmul_dtype)
    w2c = w2.astype(matmul_dtype)
    b1f = b1.reshape(1, H).astype(jnp.float32)
    b2f = b2.reshape(1, Cout).astype(jnp.float32)

    in_isz = jnp.dtype(matmul_dtype).itemsize
    out_isz = jnp.dtype(out_dtype).itemsize
    vmem_cap = int(_physical_vmem_bytes() * 0.75)

    resident = (not force_stream) and (
        _vmem_needed(tm, H, C, Cout, in_isz, out_isz, streamed=False)
        <= vmem_cap)

    if not resident:
        # Pick the largest hidden tile (multiple of 128, dividing H) that
        # fits the VMEM budget; fall back to full H (single k step).
        th_sel = H
        for cand in (4096, 3072, 2048, 1536, 1024, 768, 512, 384, 256, 128):
            if (cand <= min(th, H) and H % cand == 0 and
                    _vmem_needed(tm, cand, C, Cout, in_isz, out_isz,
                                 streamed=True) <= vmem_cap):
                th_sel = cand
                break
        th = th_sel

    needed = _vmem_needed(tm, H if resident else th, C, Cout, in_isz, out_isz,
                          streamed=not resident)
    vmem_limit = int(min(max(needed, 16 << 20), vmem_cap))

    n_row_tiles = M_pad // tm
    weight_stream_factor = 1 if resident else n_row_tiles
    cost = pl.CostEstimate(
        flops=2 * M_pad * H * (C + Cout),
        transcendentals=M_pad * H,
        bytes_accessed=int(M_pad * C * in_isz + M_pad * Cout * out_isz
                           + weight_stream_factor * (C * H + H * Cout) * in_isz
                           + (H + Cout) * 4),
    )

    if resident:
        kernel = partial(mlp_kernel_resident, gelu_tanh=gelu_tanh)
        out = pl.pallas_call(
            kernel,
            out_shape=jax.ShapeDtypeStruct((M_pad, Cout), out_dtype),
            grid_spec=pltpu.PrefetchScalarGridSpec(
                num_scalar_prefetch=0,
                grid=(n_row_tiles,),
                in_specs=[
                    pl.BlockSpec((tm, C),    lambda i: (i, 0)),  # x row tile
                    pl.BlockSpec((C, H),     lambda i: (0, 0)),  # w_fc1 (resident)
                    pl.BlockSpec((1, H),     lambda i: (0, 0)),  # b_fc1
                    pl.BlockSpec((H, Cout),  lambda i: (0, 0)),  # w_fc2 (resident)
                    pl.BlockSpec((1, Cout),  lambda i: (0, 0)),  # b_fc2
                ],
                out_specs=pl.BlockSpec((tm, Cout), lambda i: (i, 0)),
            ),
            compiler_params=pltpu.CompilerParams(
                dimension_semantics=("parallel",),
                vmem_limit_bytes=vmem_limit,
            ),
            cost_estimate=cost,
        )(x2, w1c, b1f, w2c, b2f)
    else:
        kernel = partial(mlp_kernel_streamed, gelu_tanh=gelu_tanh)
        out = pl.pallas_call(
            kernel,
            out_shape=jax.ShapeDtypeStruct((M_pad, Cout), out_dtype),
            grid_spec=pltpu.PrefetchScalarGridSpec(
                num_scalar_prefetch=0,
                grid=(n_row_tiles, H // th),
                in_specs=[
                    pl.BlockSpec((tm, C),    lambda i, k: (i, 0)),  # x row tile
                    pl.BlockSpec((C, th),    lambda i, k: (0, k)),  # w_fc1 cols
                    pl.BlockSpec((1, th),    lambda i, k: (0, k)),  # b_fc1
                    pl.BlockSpec((th, Cout), lambda i, k: (k, 0)),  # w_fc2 rows
                    pl.BlockSpec((1, Cout),  lambda i, k: (0, 0)),  # b_fc2
                ],
                out_specs=pl.BlockSpec((tm, Cout), lambda i, k: (i, 0)),
                scratch_shapes=[pltpu.VMEM((tm, Cout), jnp.float32)],
            ),
            compiler_params=pltpu.CompilerParams(
                dimension_semantics=("parallel", "arbitrary"),
                vmem_limit_bytes=vmem_limit,
            ),
            cost_estimate=cost,
        )(x2, w1c, b1f, w2c, b2f)

    if M_pad != M:
        out = out[:M]
    return out.reshape(*lead, Cout)


def mlp_ref(x, w1, b1, w2, b2):
    """Pure-JAX reference mirroring the PyTorch Mlp forward (eval mode)."""
    h = x @ w1 + b1
    h = 0.5 * h * (1.0 + jax.lax.erf(h / math.sqrt(2.0)))
    return h @ w2 + b2


if __name__ == "__main__":
    B, N, C = 2, 8, 64           # batch, tokens, in_features
    H = 4 * C                    # hidden_features (mlp_ratio = 4) -> 256

    key = jax.random.PRNGKey(0)
    kx, k1, k2, k3, k4 = jax.random.split(key, 5)
    x = jax.random.normal(kx, (B, N, C), jnp.float32)
    # Weights stored as (in, out): y = x @ W + b  ==  PyTorch x @ W_t.T + b.
    w1 = 0.02 * jax.random.normal(k1, (C, H), jnp.float32)
    b1 = 0.01 * jax.random.normal(k2, (H,), jnp.float32)
    w2 = 0.02 * jax.random.normal(k3, (H, C), jnp.float32)
    b2 = 0.01 * jax.random.normal(k4, (C,), jnp.float32)

    ref = mlp_ref(x, w1, b1, w2, b2)

    # 1) Default fast path: bf16 operands, weights resident (1-D grid).
    out = jax.block_until_ready(mlp_pallas(x, w1, b1, w2, b2))
    assert out.shape == (B, N, C) and out.dtype == x.dtype
    assert jnp.allclose(out, ref, atol=2e-2, rtol=2e-2), \
        f"bf16 resident max abs err = {jnp.max(jnp.abs(out - ref))}"

    # 2) Streamed hidden-dim path (multi-k accumulator), f32 matmuls.
    out_s = jax.block_until_ready(
        mlp_pallas(x, w1, b1, w2, b2, tm=8, th=128,
                   matmul_dtype=jnp.float32, force_stream=True))
    assert jnp.allclose(out_s, ref, atol=1e-4, rtol=1e-4), \
        f"f32 streamed max abs err = {jnp.max(jnp.abs(out_s - ref))}"

    # 3) Ragged token count (M not a multiple of 8) exercises row padding.
    x_rag = x[:, :7]
    ref_rag = mlp_ref(x_rag, w1, b1, w2, b2)
    out_rag = jax.block_until_ready(mlp_pallas(x_rag, w1, b1, w2, b2))
    assert out_rag.shape == (B, 7, C)
    assert jnp.allclose(out_rag, ref_rag, atol=2e-2, rtol=2e-2), \
        f"ragged max abs err = {jnp.max(jnp.abs(out_rag - ref_rag))}"

    # 4) bf16 activations in -> bf16 out (dtype-preserving contract).
    out_bf = jax.block_until_ready(
        mlp_pallas(x.astype(jnp.bfloat16), w1, b1, w2, b2))
    assert out_bf.dtype == jnp.bfloat16
    assert jnp.allclose(out_bf.astype(jnp.float32), ref, atol=3e-2, rtol=3e-2)

    # TODO(synk): gelu_tanh=True routes GELU to the EUP (faster on v6e/v7x)
    # but differs slightly from nn.GELU(approximate='none'); kept off by default.
    print("KERNEL_OK")
</pallas_src>

<mosaic_0001>
module attributes {stable_mosaic.version = 11 : i64} {
  func.func @mlp_kernel_resident(%arg0: i32, %arg1: memref<8x64xbf16, #tpu.memory_space<vmem>>, %arg2: memref<64x256xbf16, #tpu.memory_space<vmem>>, %arg3: memref<1x256xf32, #tpu.memory_space<vmem>>, %arg4: memref<256x64xbf16, #tpu.memory_space<vmem>>, %arg5: memref<1x64xf32, #tpu.memory_space<vmem>>, %arg6: memref<8x64xf32, #tpu.memory_space<vmem>>) attributes {dimension_semantics = [#tpu.dimension_semantics<parallel>], iteration_bounds = array<i64: 2>, scalar_prefetch = 0 : i64, scratch_operands = 0 : i64, tpu.core_type = #tpu.core_type<tc>, window_params = [{transform_indices = @transform_0, window_bounds = array<i64: 8, 64>}, {pipeline_mode = #tpu.pipeline_mode<synchronous>, transform_indices = @transform_1, window_bounds = array<i64: 64, 256>}, {pipeline_mode = #tpu.pipeline_mode<synchronous>, transform_indices = @transform_2, window_bounds = array<i64: 1, 256>}, {pipeline_mode = #tpu.pipeline_mode<synchronous>, transform_indices = @transform_3, window_bounds = array<i64: 256, 64>}, {pipeline_mode = #tpu.pipeline_mode<synchronous>, transform_indices = @transform_4, window_bounds = array<i64: 1, 64>}, {transform_indices = @transform_5, window_bounds = array<i64: 8, 64>}]} {
    %c0 = arith.constant 0 : index
    %c0_0 = arith.constant 0 : index
    %0 = vector.load %arg1[%c0, %c0_0] : memref<8x64xbf16, #tpu.memory_space<vmem>>, vector<8x64xbf16>
    %c0_1 = arith.constant 0 : index
    %c0_2 = arith.constant 0 : index
    %1 = vector.load %arg2[%c0_1, %c0_2] : memref<64x256xbf16, #tpu.memory_space<vmem>>, vector<64x256xbf16>
    %cst = arith.constant dense<0.000000e+00> : vector<8x256xf32>
    %2 = tpu.matmul %0, %1, %cst {dimension_numbers = #tpu.dot_dimension_numbers<[1], [0], [0], [1], [0, 0, 1, 1], [], []>} : vector<8x64xbf16>, vector<64x256xbf16>, vector<8x256xf32> -> vector<8x256xf32>
    %c0_3 = arith.constant 0 : index
    %c0_4 = arith.constant 0 : index
    %3 = vector.load %arg3[%c0_3, %c0_4] : memref<1x256xf32, #tpu.memory_space<vmem>>, vector<1x256xf32>
    %4 = vector.broadcast %3 : vector<1x256xf32> to vector<8x256xf32>
    %5 = arith.addf %2, %4 : vector<8x256xf32>
    %cst_5 = arith.constant 5.000000e-01 : f32
    %6 = vector.broadcast %cst_5 : f32 to vector<8x256xf32>
    %7 = arith.mulf %6, %5 : vector<8x256xf32>
    %cst_6 = arith.constant 0.707106769 : f32
    %8 = vector.broadcast %cst_6 : f32 to vector<8x256xf32>
    %9 = arith.mulf %5, %8 : vector<8x256xf32>
    %10 = math.erf %9 : vector<8x256xf32>
    %cst_7 = arith.constant 1.000000e+00 : f32
    %11 = vector.broadcast %cst_7 : f32 to vector<8x256xf32>
    %12 = arith.addf %11, %10 : vector<8x256xf32>
    %13 = arith.mulf %7, %12 : vector<8x256xf32>
    %14 = arith.truncf %13 : vector<8x256xf32> to vector<8x256xbf16>
    %c0_8 = arith.constant 0 : index
    %c0_9 = arith.constant 0 : index
    %15 = vector.load %arg4[%c0_8, %c0_9] : memref<256x64xbf16, #tpu.memory_space<vmem>>, vector<256x64xbf16>
    %cst_10 = arith.constant dense<0.000000e+00> : vector<8x64xf32>
    %16 = tpu.matmul %14, %15, %cst_10 {dimension_numbers = #tpu.dot_dimension_numbers<[1], [0], [0], [1], [0, 0, 1, 1], [], []>} : vector<8x256xbf16>, vector<256x64xbf16>, vector<8x64xf32> -> vector<8x64xf32>
    %c0_11 = arith.constant 0 : index
    %c0_12 = arith.constant 0 : index
    %17 = vector.load %arg5[%c0_11, %c0_12] : memref<1x64xf32, #tpu.memory_space<vmem>>, vector<1x64xf32>
    %18 = vector.broadcast %17 : vector<1x64xf32> to vector<8x64xf32>
    %19 = arith.addf %16, %18 : vector<8x64xf32>
    %c0_13 = arith.constant 0 : index
    %c0_14 = arith.constant 0 : index
    %20 = vector.load %arg6[%c0_13, %c0_14] : memref<8x64xf32, #tpu.memory_space<vmem>>, vector<8x64xf32>
    tpu.vector_store %arg6[%c0_13, %c0_14], %19 {strides = array<i32>} : memref<8x64xf32, #tpu.memory_space<vmem>>, vector<8x64xf32>,
    return
  }
  func.func @transform_0(%arg0: i32) -> (i32, i32) {
    %c0_i32 = arith.constant 0 : i32
    %c0_i32_0 = arith.constant 0 : i32
    return %arg0, %c0_i32 : i32, i32
  }
  func.func @transform_1(%arg0: i32) -> (i32, i32) {
    %c0_i32 = arith.constant 0 : i32
    %c0_i32_0 = arith.constant 0 : i32
    %c0_i32_1 = arith.constant 0 : i32
    return %c0_i32, %c0_i32_0 : i32, i32
  }
  func.func @transform_2(%arg0: i32) -> (i32, i32) {
    %c0_i32 = arith.constant 0 : i32
    %c0_i32_0 = arith.constant 0 : i32
    %c0_i32_1 = arith.constant 0 : i32
    return %c0_i32, %c0_i32_0 : i32, i32
  }
  func.func @transform_3(%arg0: i32) -> (i32, i32) {
    %c0_i32 = arith.constant 0 : i32
    %c0_i32_0 = arith.constant 0 : i32
    %c0_i32_1 = arith.constant 0 : i32
    return %c0_i32, %c0_i32_0 : i32, i32
  }
  func.func @transform_4(%arg0: i32) -> (i32, i32) {
    %c0_i32 = arith.constant 0 : i32
    %c0_i32_0 = arith.constant 0 : i32
    %c0_i32_1 = arith.constant 0 : i32
    return %c0_i32, %c0_i32_0 : i32, i32
  }
  func.func @transform_5(%arg0: i32) -> (i32, i32) {
    %c0_i32 = arith.constant 0 : i32
    %c0_i32_0 = arith.constant 0 : i32
    return %arg0, %c0_i32 : i32, i32
  }
}

</mosaic_0001>

<llo_original>
// kernel: tpu_custom_call.1
$region0: #{tpu_custom_call.1}
  #allocation0 [shape = 'u32[]', space=smem, size = 0x4, offset = 0x4, fixed_abs, tag = 'smem constant byte address 0x4 - core index']
  #allocation1 [shape = 'u32[144,128]{1,0:T(1,128)}', space=vmem, size = 0x12000, scoped, tag = 'internal scratch']
  %s0 = inlined_call_operand.vmem [shape: bf16[16,64], index: 0, kind: input, shape index: {}]
  %s1 = inlined_call_operand.vmem [shape: bf16[64,256], index: 1, kind: input, shape index: {}]
  %s2 = inlined_call_operand.vmem [shape: f32[1,256], index: 2, kind: input, shape index: {}]
  %s3 = inlined_call_operand.vmem [shape: bf16[256,64], index: 3, kind: input, shape index: {}]
  %s4 = inlined_call_operand.vmem [shape: f32[1,64], index: 4, kind: input, shape index: {}]
  %s5 = inlined_call_operand.hbm [shape: f32[16,64], index: 5, kind: output, shape index: {}]
  %s6 = sld [smem:[#allocation0]]
  $region53: #{tpu_custom_call.1} parent=0
    _
  %s8 = ssub.s32 1, %s6
  %s9 = scalar_select 0, %s8, %s6
  $region1: #{tpu_custom_call.1} parent=0
    #allocation2 [shape = 'u8[8192]{0}', space=vmem, size = 0x2000, scoped, tag = 'output window, operand 0']
    #allocation3 [shape = 's32[2]{0}', space=sflag, size = 0x8, scoped, tag = 'scoped memory for tpu_custom_call.1']
    %10 = vsyncpa [#allocation3], 0
    %s11 = scalar_lea.sflag [#allocation3], 1
    %12 = vsyncpa %s11, 0
    loop: start=0, step=1, limit=4
    $region2: #{tpu_custom_call.1} parent=1 // loop_pre_header
      _
    $region3: #{tpu_custom_call.1} parent=1 // loop_header
      %s14 = sphi 0, %s18
      %p15 = scmp.ge.s32.totalorder %s14, 4
      %s24 = sphi 0, %s26
      %s27 = sphi 0, %s24
      %s28 = sphi 0, %s27
      %s44 = sphi 0, %s28
      %s48 = sphi 0, %s48
      %s50 = sphi 0, %s48
      %s51 = sphi 0, %s50
      %s65 = sphi 0, %s51
      %s69 = sphi 0, %s69
      %s71 = sphi 0, %s69
      %s72 = sphi 0, %s71
      %s86 = sphi 0, %s72
      %s90 = sphi 0, %s90
      %s92 = sphi 0, %s90
      %s93 = sphi 0, %s92
      %s107 = sphi 0, %s93
      %s111 = sphi 0, %s111
      %s113 = sphi 0, %s111
      %s114 = sphi 0, %s113
      %s128 = sphi 0, %s114
      %s134 = sphi 0, %s136
      %s137 = sphi 0, %s134
      %s138 = sphi 0, %s137
      %s154 = sphi 0, %s138
    $region4: #{tpu_custom_call.1} parent=1 // loop_header_branch
      %17 = sbr.rel (%p15) target = $region8
    $region5: #{tpu_custom_call.1} parent=1 // loop_body
      %s19 = ssub.s32 %s14, 1
      %s20 = ssub.s32 %s14, 2
      %s21 = sadd.s32 %s14, 1
      %s22 = ssub.s32 %s14, %s21
      %p23 = scmp.eq.s32.totalorder %s22, 0
      %s25 = sadd.s32 %s24, 1
      %s26 = scalar_select %p23, %s24, %s25
      %p29 = pneg %p23
      %p30 = scmp.eq.s32.totalorder %s14, 1
      %p31 = por %p29, %p30
      %p32 = scmp.ne.s32.totalorder %s24, %s27
      %p33 = scmp.eq.s32.totalorder %s14, 0
      %p34 = por %p32, %p33
      %p35 = scmp.ne.s32.totalorder %s24, %s27
      %p36 = scmp.eq.s32.totalorder %s19, 1
      %p37 = por %p35, %p36
      %p38 = scmp.ne.s32.totalorder %s27, %s28
      %p39 = scmp.eq.s32.totalorder %s19, 0
      %p40 = por %p38, %p39
      %p41 = scmp.ne.s32.totalorder %s27, %s28
      %p42 = scmp.eq.s32.totalorder %s20, 1
      %p43 = por %p41, %p42
      %p45 = scmp.ne.s32.totalorder %s28, %s44
      %p46 = scmp.eq.s32.totalorder %s20, 0
      %p47 = por %p45, %p46
      %s49 = sadd.s32 %s48, 1
      %p52 = scmp.eq.s32.totalorder %s14, 1
      %p53 = scmp.ne.s32.totalorder %s48, %s50
      %p54 = scmp.eq.s32.totalorder %s14, 0
      %p55 = por %p53, %p54
      %p56 = scmp.ne.s32.totalorder %s48, %s50
      %p57 = scmp.eq.s32.totalorder %s19, 1
      %p58 = por %p56, %p57
      %p59 = scmp.ne.s32.totalorder %s50, %s51
      %p60 = scmp.eq.s32.totalorder %s19, 0
      %p61 = por %p59, %p60
      %p62 = scmp.ne.s32.totalorder %s50, %s51
      %p63 = scmp.eq.s32.totalorder %s20, 1
      %p64 = por %p62, %p63
      %p66 = scmp.ne.s32.totalorder %s51, %s65
      %p67 = scmp.eq.s32.totalorder %s20, 0
      %p68 = por %p66, %p67
      %s70 = sadd.s32 %s69, 1
      %p73 = scmp.eq.s32.totalorder %s14, 1
      %p74 = scmp.ne.s32.totalorder %s69, %s71
      %p75 = scmp.eq.s32.totalorder %s14, 0
      %p76 = por %p74, %p75
      %p77 = scmp.ne.s32.totalorder %s69, %s71
      %p78 = scmp.eq.s32.totalorder %s19, 1
      %p79 = por %p77, %p78
      %p80 = scmp.ne.s32.totalorder %s71, %s72
      %p81 = scmp.eq.s32.totalorder %s19, 0
      %p82 = por %p80, %p81
      %p83 = scmp.ne.s32.totalorder %s71, %s72
      %p84 = scmp.eq.s32.totalorder %s20, 1
      %p85 = por %p83, %p84
      %p87 = scmp.ne.s32.totalorder %s72, %s86
      %p88 = scmp.eq.s32.totalorder %s20, 0
      %p89 = por %p87, %p88
      %s91 = sadd.s32 %s90, 1
      %p94 = scmp.eq.s32.totalorder %s14, 1
      %p95 = scmp.ne.s32.totalorder %s90, %s92
      %p96 = scmp.eq.s32.totalorder %s14, 0
      %p97 = por %p95, %p96
      %p98 = scmp.ne.s32.totalorder %s90, %s92
      %p99 = scmp.eq.s32.totalorder %s19, 1
      %p100 = por %p98, %p99
      %p101 = scmp.ne.s32.totalorder %s92, %s93
      %p102 = scmp.eq.s32.totalorder %s19, 0
      %p103 = por %p101, %p102
      %p104 = scmp.ne.s32.totalorder %s92, %s93
      %p105 = scmp.eq.s32.totalorder %s20, 1
      %p106 = por %p104, %p105
      %p108 = scmp.ne.s32.totalorder %s93, %s107
      %p109 = scmp.eq.s32.totalorder %s20, 0
      %p110 = por %p108, %p109
      %s112 = sadd.s32 %s111, 1
      %p115 = scmp.eq.s32.totalorder %s14, 1
      %p116 = scmp.ne.s32.totalorder %s111, %s113
      %p117 = scmp.eq.s32.totalorder %s14, 0
      %p118 = por %p116, %p117
      %p119 = scmp.ne.s32.totalorder %s111, %s113
      %p120 = scmp.eq.s32.totalorder %s19, 1
      %p121 = por %p119, %p120
      %p122 = scmp.ne.s32.totalorder %s113, %s114
      %p123 = scmp.eq.s32.totalorder %s19, 0
      %p124 = por %p122, %p123
      %p125 = scmp.ne.s32.totalorder %s113, %s114
      %p126 = scmp.eq.s32.totalorder %s20, 1
      %p127 = por %p125, %p126
      %p129 = scmp.ne.s32.totalorder %s114, %s128
      %p130 = scmp.eq.s32.totalorder %s20, 0
      %p131 = por %p129, %p130
      %s132 = ssub.s32 %s14, %s21
      %p133 = scmp.eq.s32.totalorder %s132, 0
      %s135 = sadd.s32 %s134, 1
      %s136 = scalar_select %p133, %s134, %s135
      %p139 = pneg %p133
      %p140 = scmp.eq.s32.totalorder %s14, 1
      %p141 = por %p139, %p140
      %p142 = scmp.ne.s32.totalorder %s134, %s137
      %p143 = scmp.eq.s32.totalorder %s14, 0
      %p144 = por %p142, %p143
      %p145 = scmp.ne.s32.totalorder %s134, %s137
      %p146 = scmp.eq.s32.totalorder %s19, 1
      %p147 = por %p145, %p146
      %p148 = scmp.ne.s32.totalorder %s137, %s138
      %p149 = scmp.eq.s32.totalorder %s19, 0
      %p150 = por %p148, %p149
      %p151 = scmp.ne.s32.totalorder %s137, %s138
      %p152 = scmp.eq.s32.totalorder %s20, 1
      %p153 = por %p151, %p152
      %p155 = scmp.ne.s32.totalorder %s138, %s154
      %p156 = scmp.eq.s32.totalorder %s20, 0
      %p157 = por %p155, %p156
      %p158 = scmp.le.s32.totalorder 1, %s14
      %p159 = scmp.lt.s32.totalorder %s14, 3
      %p160 = pnand %p158, %p159
      %p161 = pneg %p160
      // Predicated region
      $region9: #{tpu_custom_call.1} parent=5 // pred_check
        _
      $region10: #{tpu_custom_call.1} parent=5 // pred_check_branch
        %163 = sbr.rel (%p160) target = $region12
      $region11: #{tpu_custom_call.1} parent=5 // pred_region
        %s164 = ssub.s32 %s14, 1
        // Predicated region
        $region13: #{tpu_custom_call.1} parent=11 // pred_check
          %p165 = pneg %p61
        $region14: #{tpu_custom_call.1} parent=11 // pred_check_branch
          %167 = sbr.rel (%p165) target = $region16
        $region15: #{tpu_custom_call.1} parent=11 // pred_region
          _
        $region16: #{tpu_custom_call.1} parent=11 // pred_fallthru
          _
        // Predicated region
        $region17: #{tpu_custom_call.1} parent=11 // pred_check
          %p168 = pneg %p82
        $region18: #{tpu_custom_call.1} parent=11 // pred_check_branch
          %170 = sbr.rel (%p168) target = $region20
        $region19: #{tpu_custom_call.1} parent=11 // pred_region
          _
        $region20: #{tpu_custom_call.1} parent=11 // pred_fallthru
          _
        // Predicated region
        $region21: #{tpu_custom_call.1} parent=11 // pred_check
          %p171 = pneg %p103
        $region22: #{tpu_custom_call.1} parent=11 // pred_check_branch
          %173 = sbr.rel (%p171) target = $region24
        $region23: #{tpu_custom_call.1} parent=11 // pred_region
          _
        $region24: #{tpu_custom_call.1} parent=11 // pred_fallthru
          _
        // Predicated region
        $region25: #{tpu_custom_call.1} parent=11 // pred_check
          %p174 = pneg %p124
        $region26: #{tpu_custom_call.1} parent=11 // pred_check_branch
          %176 = sbr.rel (%p174) target = $region28
        $region27: #{tpu_custom_call.1} parent=11 // pred_region
          _
        $region28: #{tpu_custom_call.1} parent=11 // pred_fallthru
          _
      $region12: #{tpu_custom_call.1} parent=5 // pred_fallthru
        _
      %p177 = scmp.lt.s32.totalorder %s14, 2
      // Predicated region
      $region29: #{tpu_custom_call.1} parent=5 // pred_check
        %p178 = pneg %p177
      $region30: #{tpu_custom_call.1} parent=5 // pred_check_branch
        %180 = sbr.rel (%p178) target = $region32
      $region31: #{tpu_custom_call.1} parent=5 // pred_region
        // Predicated region
        $region33: #{tpu_custom_call.1} parent=31 // pred_check
          %p181 = pneg %p34
        $region34: #{tpu_custom_call.1} parent=31 // pred_check_branch
          %183 = sbr.rel (%p181) target = $region36
        $region35: #{tpu_custom_call.1} parent=31 // pred_region
          %p184 = scmp.lt.s32.totalorder %s14, 1
          %s185 = scalar_select %p184, %s14, 1
          %s186 = smul.addr %s185, 4
          %s187 = scalar_lea.vmem %s0, %s186
        $region36: #{tpu_custom_call.1} parent=31 // pred_fallthru
          _
      $region32: #{tpu_custom_call.1} parent=5 // pred_fallthru
        _
      %p188 = scmp.le.s32.totalorder 1, %s14
      %p189 = scmp.lt.s32.totalorder %s14, 3
      %p190 = pnand %p188, %p189
      %p191 = pneg %p190
      // Predicated region
      $region37: #{tpu_custom_call.1} parent=5 // pred_check
        _
      $region38: #{tpu_custom_call.1} parent=5 // pred_check_branch
        %193 = sbr.rel (%p190) target = $region40
      $region39: #{tpu_custom_call.1} parent=5 // pred_region
        %s194 = ssub.s32 %s14, 1
        %p195 = scmp.lt.s32.totalorder %s19, 1
        %s196 = scalar_select %p195, %s19, 1
        %s197 = smul.addr %s196, 4
        %s198 = scalar_lea.vmem %s0, %s197
        %p199 = pneg %p40
        %p200 = pneg %p37
        %p201 = pneg %p61
        %p202 = pneg %p58
        %p203 = pneg %p82
        %p204 = pneg %p79
        %p205 = pneg %p103
        %p206 = pneg %p100
        %p207 = pneg %p124
        %p208 = pneg %p121
        %p209 = pneg %p150
        %p210 = pneg %p147
        %s211 = sand.u32 %s137, 1
        %s212 = scalar_lea.sflag [#allocation3], %s211
        %s213 = sand.u32 %s137, 1
        %s214 = smul.addr %s213, 8
        %s215 = scalar_lea.vmem [#allocation2], %s214
        %p216 = scmp.lt.s32.totalorder %s19, 1
        %s217 = scalar_select %p216, %s19, 1
        %s218 = smul.addr %s217, 4
        %s219 = scalar_lea.vmem %s0, %s218
        %v221 = vld [vmem:[%s219] sm:$0xf]
        %v222 = vld [vmem:[%s1] sm:$0xff]
        %v223 = vld [vmem:[%s1 + $0x8] sm:$0xff]
        %v224 = vld [vmem:[%s1 + $0x10] sm:$0xff]
        %v225 = vld [vmem:[%s1 + $0x18] sm:$0xff]
        %v226 = vld [vmem:[%s1 + $0x20] sm:$0xff]
        %v227 = vld [vmem:[%s1 + $0x28] sm:$0xff]
        %v228 = vld [vmem:[%s1 + $0x30] sm:$0xff]
        %v229 = vld [vmem:[%s1 + $0x38] sm:$0xff]
        %v230 = vld [vmem:[%s2] sm:$0x3]
        %v232 = vlaneseq
        %v233 = vshrl.u32 %v232, 7
        %v234 = vsub.s32 0, %v233
        %v235 = vrot.slane %v230, %v234
        %v236 = vlaneseq
        %v237 = vshrl.u32 %v236, 7
        %v238 = vsub.s32 1, %v237
        %v239 = vrot.slane %v230, %v238
        %v250 = vunpack.c.l.b16 %v222
        %v251 = vunpack.c.h.b16 %v222
        %v252 = vunpack.c.l.b16 %v223
        %v253 = vunpack.c.h.b16 %v223
        %v254 = vunpack.c.l.b16 %v224
        %v255 = vunpack.c.h.b16 %v224
        %v256 = vunpack.c.l.b16 %v225
        %v257 = vunpack.c.h.b16 %v225
        %v258 = vunpack.c.l.b16 %v226
        %v259 = vunpack.c.h.b16 %v226
        %v260 = vunpack.c.l.b16 %v227
        %v261 = vunpack.c.h.b16 %v227
        %v262 = vunpack.c.l.b16 %v228
        %v263 = vunpack.c.h.b16 %v228
        %v264 = vunpack.c.l.b16 %v229
        %v265 = vunpack.c.h.b16 %v229
        %v266 = vpack.c.b16 %v252, %v250
        %v267 = vpack.c.b16 %v253, %v251
        %v268 = vpack.c.b16 %v256, %v254
        %v269 = vpack.c.b16 %v257, %v255
        %v270 = vpack.c.b16 %v260, %v258
        %v271 = vpack.c.b16 %v261, %v259
        %v272 = vpack.c.b16 %v264, %v262
        %v273 = vpack.c.b16 %v265, %v263
        %vm282 = vcmask 523264
        %v284 = vsel %vm282, %v221, 0
        %286 = vmatprep.subr.bf16.mxu0 0
        %287 = vmatpush1.bf16.msra.mxu0 0
        %288 = vmatprep.subr.bf16.mxu0 0
        %289 = vmatpush1.bf16.msra.mxu0 0
        %290 = vmatprep.subr.bf16.mxu0 0
        %291 = vmatpush1.bf16.msra.mxu0 0
        %292 = vmatprep.subr.bf16.mxu0 0
        %293 = vmatpush1.bf16.msra.mxu0 0
        %294 = vmatprep.subr.bf16.mxu0 %v273
        %295 = vmatpush1.bf16.msra.mxu0 %v272
        %296 = vmatprep.subr.bf16.mxu0 %v271
        %297 = vmatpush1.bf16.msra.mxu0 %v270
        %298 = vmatprep.subr.bf16.mxu0 %v269
        %299 = vmatpush1.bf16.msra.mxu0 %v268
        %300 = vmatprep.subr.bf16.mxu0 %v267
        %301 = vmatpush1.bf16.msra.mxu0 %v266
        %302 = vmatprep.subr.bf16.mxu0 0
        %303 = vmatpush2.bf16.msra.mxu0 0
        %304 = vmatprep.subr.bf16.mxu0 0
        %305 = vmatpush2.bf16.msra.mxu0 0
        %306 = vmatprep.subr.bf16.mxu0 0
        %307 = vmatpush2.bf16.msra.mxu0 0
        %308 = vmatprep.subr.bf16.mxu0 0
        %309 = vmatpush2.bf16.msra.mxu0 0
        %310 = vmatprep.subr.bf16.mxu0 0
        %311 = vmatpush2.bf16.msra.mxu0 0
        %312 = vmatprep.subr.bf16.mxu0 0
        %313 = vmatpush2.bf16.msra.mxu0 0
        %314 = vmatprep.subr.bf16.mxu0 0
        %315 = vmatpush2.bf16.msra.mxu0 0
        %316 = vmatprep.subr.bf16.mxu0 0
        %317 = vmatpush2.bf16.msra.mxu0 0
        %318 = vmatprep.mubr.bf16.mxu0 0
        %319 = vmatmul.mubr.bf16.gmra.mxu0 %v284
        %v320 = vpop.f32.mrf.mxu0
        %v321 = vadd.f32 %v235, %v320
        %v322 = vpop.f32.mrf.mxu0
        %v323 = vadd.f32 %v239, %v322
        %v324 = vpop.f32.mrf.mxu0
        %v325 = vpop.f32.mrf.mxu0
        %326 = vdwg.mxu0
        %v327 = vmul.f32 %v321, 0.5
        %v328 = vmul.f32 %v323, 0.5
        %v329 = vmul.f32 %v321, 0.70710677
        %v330 = vmul.f32 %v323, 0.70710677
        %v331 = verf.f32.pop %v329
        %v332 = verf.f32.pop %v330
        %v333 = vadd.f32 %v331, 1.0
        %v334 = vadd.f32 %v332, 1.0
        %v335 = vmul.f32 %v327, %v333
        %v336 = vmul.f32 %v328, %v334
        %v337 = vpack.c.bf16 %v335, %v335
        %v338 = vpack.c.bf16 %v336, %v336
        %v339 = vld [vmem:[%s3] sm:$0xf]
        %v340 = vld [vmem:[%s3 + $0x4] sm:$0xf]
        %v341 = vld [vmem:[%s3 + $0x8] sm:$0xf]
        %v342 = vld [vmem:[%s3 + $0xc] sm:$0xf]
        %v343 = vld [vmem:[%s3 + $0x10] sm:$0xf]
        %v344 = vld [vmem:[%s3 + $0x14] sm:$0xf]
        %v345 = vld [vmem:[%s3 + $0x18] sm:$0xf]
        %v346 = vld [vmem:[%s3 + $0x1c] sm:$0xf]
        %v347 = vld [vmem:[%s3 + $0x20] sm:$0xf]
        %v348 = vld [vmem:[%s3 + $0x24] sm:$0xf]
        %v349 = vld [vmem:[%s3 + $0x28] sm:$0xf]
        %v350 = vld [vmem:[%s3 + $0x2c] sm:$0xf]
        %v351 = vld [vmem:[%s3 + $0x30] sm:$0xf]
        %v352 = vld [vmem:[%s3 + $0x34] sm:$0xf]
        %v353 = vld [vmem:[%s3 + $0x38] sm:$0xf]
        %v354 = vld [vmem:[%s3 + $0x3c] sm:$0xf]
        %v355 = vld [vmem:[%s3 + $0x40] sm:$0xf]
        %v356 = vld [vmem:[%s3 + $0x44] sm:$0xf]
        %v357 = vld [vmem:[%s3 + $0x48] sm:$0xf]
        %v358 = vld [vmem:[%s3 + $0x4c] sm:$0xf]
        %v359 = vld [vmem:[%s3 + $0x50] sm:$0xf]
        %v360 = vld [vmem:[%s3 + $0x54] sm:$0xf]
        %v361 = vld [vmem:[%s3 + $0x58] sm:$0xf]
        %v362 = vld [vmem:[%s3 + $0x5c] sm:$0xf]
        %v363 = vld [vmem:[%s3 + $0x60] sm:$0xf]
        %v364 = vld [vmem:[%s3 + $0x64] sm:$0xf]
        %v365 = vld [vmem:[%s3 + $0x68] sm:$0xf]
        %v366 = vld [vmem:[%s3 + $0x6c] sm:$0xf]
        %v367 = vld [vmem:[%s3 + $0x70] sm:$0xf]
        %v368 = vld [vmem:[%s3 + $0x74] sm:$0xf]
        %v369 = vld [vmem:[%s3 + $0x78] sm:$0xf]
        %v370 = vld [vmem:[%s3 + $0x7c] sm:$0xf]
        %v371 = vld [vmem:[%s4] sm:$0x1]
        %v373 = vlaneseq
        %v374 = vshrl.u32 %v373, 7
        %v375 = vsub.s32 0, %v374
        %v376 = vrot.slane %v371, %v375
        %v410 = vunpack.c.l.b16 %v339
        %v411 = vunpack.c.l.b16 %v340
        %v412 = vunpack.c.l.b16 %v341
        %v413 = vunpack.c.l.b16 %v342
        %v414 = vunpack.c.l.b16 %v343
        %v415 = vunpack.c.l.b16 %v344
        %v416 = vunpack.c.l.b16 %v345
        %v417 = vunpack.c.l.b16 %v346
        %v418 = vunpack.c.l.b16 %v347
        %v419 = vunpack.c.l.b16 %v348
        %v420 = vunpack.c.l.b16 %v349
        %v421 = vunpack.c.l.b16 %v350
        %v422 = vunpack.c.l.b16 %v351
        %v423 = vunpack.c.l.b16 %v352
        %v424 = vunpack.c.l.b16 %v353
        %v425 = vunpack.c.l.b16 %v354
        %v426 = vunpack.c.l.b16 %v355
        %v427 = vunpack.c.l.b16 %v356
        %v428 = vunpack.c.l.b16 %v357
        %v429 = vunpack.c.l.b16 %v358
        %v430 = vunpack.c.l.b16 %v359
        %v431 = vunpack.c.l.b16 %v360
        %v432 = vunpack.c.l.b16 %v361
        %v433 = vunpack.c.l.b16 %v362
        %v434 = vunpack.c.l.b16 %v363
        %v435 = vunpack.c.l.b16 %v364
        %v436 = vunpack.c.l.b16 %v365
        %v437 = vunpack.c.l.b16 %v366
        %v438 = vunpack.c.l.b16 %v367
        %v439 = vunpack.c.l.b16 %v368
        %v440 = vunpack.c.l.b16 %v369
        %v441 = vunpack.c.l.b16 %v370
        %v442 = vpack.c.b16 %v411, %v410
        %v443 = vpack.c.b16 %v413, %v412
        %v444 = vpack.c.b16 %v415, %v414
        %v445 = vpack.c.b16 %v417, %v416
        %v446 = vpack.c.b16 %v419, %v418
        %v447 = vpack.c.b16 %v421, %v420
        %v448 = vpack.c.b16 %v423, %v422
        %v449 = vpack.c.b16 %v425, %v424
        %v450 = vpack.c.b16 %v427, %v426
        %v451 = vpack.c.b16 %v429, %v428
        %v452 = vpack.c.b16 %v431, %v430
        %v453 = vpack.c.b16 %v433, %v432
        %v454 = vpack.c.b16 %v435, %v434
        %v455 = vpack.c.b16 %v437, %v436
        %v456 = vpack.c.b16 %v439, %v438
        %v457 = vpack.c.b16 %v441, %v440
        %474 = vmatprep.subr.bf16.mxu0 0
        %475 = vmatpush1.bf16.msra.mxu0 %v449
        %476 = vmatprep.subr.bf16.mxu0 0
        %477 = vmatpush1.bf16.msra.mxu0 %v448
        %478 = vmatprep.subr.bf16.mxu0 0
        %479 = vmatpush1.bf16.msra.mxu0 %v447
        %480 = vmatprep.subr.bf16.mxu0 0
        %481 = vmatpush1.bf16.msra.mxu0 %v446
        %482 = vmatprep.subr.bf16.mxu0 0
        %483 = vmatpush1.bf16.msra.mxu0 %v445
        %484 = vmatprep.subr.bf16.mxu0 0
        %485 = vmatpush1.bf16.msra.mxu0 %v444
        %486 = vmatprep.subr.bf16.mxu0 0
        %487 = vmatpush1.bf16.msra.mxu0 %v443
        %488 = vmatprep.subr.bf16.mxu0 0
        %489 = vmatpush1.bf16.msra.mxu0 %v442
        %490 = vmatprep.subr.bf16.mxu0 0
        %491 = vmatpush2.bf16.msra.mxu0 %v457
        %492 = vmatprep.subr.bf16.mxu0 0
        %493 = vmatpush2.bf16.msra.mxu0 %v456
        %494 = vmatprep.subr.bf16.mxu0 0
        %495 = vmatpush2.bf16.msra.mxu0 %v455
        %496 = vmatprep.subr.bf16.mxu0 0
        %497 = vmatpush2.bf16.msra.mxu0 %v454
        %498 = vmatprep.subr.bf16.mxu0 0
        %499 = vmatpush2.bf16.msra.mxu0 %v453
        %500 = vmatprep.subr.bf16.mxu0 0
        %501 = vmatpush2.bf16.msra.mxu0 %v452
        %502 = vmatprep.subr.bf16.mxu0 0
        %503 = vmatpush2.bf16.msra.mxu0 %v451
        %504 = vmatprep.subr.bf16.mxu0 0
        %505 = vmatpush2.bf16.msra.mxu0 %v450
        %506 = vmatprep.mubr.bf16.mxu0 %v338
        %507 = vmatmul.mubr.bf16.gmra.mxu0 %v337
        %v508 = vpop.f32.mrf.mxu0
        %v509 = vadd.f32 %v376, %v508
        %v510 = vpop.f32.mrf.mxu0
        %v511 = vpop.f32.mrf.mxu0
        %v512 = vpop.f32.mrf.mxu0
        %513 = vdwg.mxu0
        %514 = vst.msk [vmem:[%s215] sm:$0xff] %vm282, %v509
        %s515 = sand.u32 %s137, 1
        %s516 = scalar_lea.sflag [#allocation3], %s515
        %s517 = sand.u32 %s137, 1
        %s518 = smul.addr %s517, 8
        %s519 = scalar_lea.vmem [#allocation2], %s518
        // Predicated region
        $region41: #{tpu_custom_call.1} parent=39 // pred_check
          %p520 = pneg %p147
        $region42: #{tpu_custom_call.1} parent=39 // pred_check_branch
          %522 = sbr.rel (%p520) target = $region44
        $region43: #{tpu_custom_call.1} parent=39 // pred_region
          %s524 = ssub.s32 128, 128
          %525 = vsyncadd %s516, %s524
          %s526 = smul.addr %s19, 128
          %s527 = scalar_lea.hbm %s5, %s526
          %s529 = sshll.u32 %s519, 4
          %s530 = int_to_ptr.vmem [resolvable:$true] %s529
          %532 = dma.vmem_to_hbm [thread:$0]  %s530, 128, %s527, %s516
        $region44: #{tpu_custom_call.1} parent=39 // pred_fallthru
          _
      $region40: #{tpu_custom_call.1} parent=5 // pred_fallthru
        _
      %p533 = scmp.le.s32.totalorder 2, %s14
      // Predicated region
      $region45: #{tpu_custom_call.1} parent=5 // pred_check
        %p534 = pneg %p533
      $region46: #{tpu_custom_call.1} parent=5 // pred_check_branch
        %536 = sbr.rel (%p534) target = $region48
      $region47: #{tpu_custom_call.1} parent=5 // pred_region
        %s537 = ssub.s32 %s14, 2
        // Predicated region
        $region49: #{tpu_custom_call.1} parent=47 // pred_check
          %p538 = pneg %p153
        $region50: #{tpu_custom_call.1} parent=47 // pred_check_branch
          %540 = sbr.rel (%p538) target = $region52
        $region51: #{tpu_custom_call.1} parent=47 // pred_region
          %s541 = sand.u32 %s138, 1
          %s542 = scalar_lea.sflag [#allocation3], %s541
          %s543 = sand.u32 %s138, 1
          %s544 = smul.addr %s543, 8
          %s545 = scalar_lea.vmem [#allocation2], %s544
          %546 = dma.done %s542, 128
        $region52: #{tpu_custom_call.1} parent=47 // pred_fallthru
          _
      $region48: #{tpu_custom_call.1} parent=5 // pred_fallthru
        _
    $region6: #{tpu_custom_call.1} parent=1 // loop_footer
      %s18 = sadd.s32 1, %s14
    $region7: #{tpu_custom_call.1} parent=1 // loop_footer_branch
      %13 = sbr.rel target = $region3
    $region8: #{tpu_custom_call.1} parent=1 // loop_exit
      _
    %547 = vsyncpa [#allocation3], 1
    %s548 = scalar_lea.sflag [#allocation3], 1
    %549 = vsyncpa %s548, 1

</llo_original>
